<compile_context>
chip_gen: v7x
topology: tpu7x:2x2x1
jax: 0.10.0
libtpu: 0.0.40
codegen_flags: <defaults>
</compile_context>

<pallas_src>
import functools

import jax
import jax.numpy as jnp
import numpy as np
from jax.experimental import pallas as pl
from jax.experimental.pallas import tpu as pltpu


def _round_up(x, m):
    return -(-x // m) * m


# ---------------------------------------------------------------------------
# Fused kernel: one MXU matmul generates all per-group weights + bias for a
# lane chunk, then a lane-dense VPU FMA loop applies the grouped 1x1 conv.
# ---------------------------------------------------------------------------
def _fused_meta_linear_kernel(mkT_ref, x_ref, w_ref, o_ref, *, c_in, c_out, chunk):
    """
    mkT_ref : [d+1, Gb]   meta-knowledge^T augmented with a ones row, G on lanes
    x_ref   : [c_in, T, Gb]  input slab, G on lanes
    w_ref   : [R, d+1]    composed generator weights (R = c_in*c_out + c_out),
                          all biases already folded into the last column
    o_ref   : [c_out, T, Gb]
    """
    T = x_ref.shape[1]
    Gb = x_ref.shape[2]
    n_w = c_in * c_out
    w = w_ref[...]                                    # tiny, grid-resident

    for start in range(0, Gb, chunk):
        size = min(chunk, Gb - start)
        sl = pl.ds(start, size)
        # ONE MXU matmul generates every per-group weight AND bias for this
        # lane chunk:
        #   wct[ci*c_out + co, g] == W[g, ci, co]
        #   wct[n_w + co,      g] == bias[g, co]
        wct = jnp.dot(w, mkT_ref[:, sl], preferred_element_type=jnp.float32)  # [R, size]

        # Grouped 1x1 conv: lane-dense VPU FMAs over c_in, streamed from VMEM
        # refs so the live set stays ~(wct + one x tile + one acc) per chunk.
        for co in range(c_out):
            acc = wct[co:co + 1, :] * x_ref[0, :, sl]                 # ci = 0
            for ci in range(1, c_in):
                r = ci * c_out + co
                acc = acc + wct[r:r + 1, :] * x_ref[ci, :, sl]
            acc = acc + wct[n_w + co:n_w + co + 1, :]                 # per-group bias
            o_ref[co, :, sl] = acc.astype(o_ref.dtype)


# ---------------------------------------------------------------------------
# Offline composition of the weight-generation Linears (exact, amortizable).
# ---------------------------------------------------------------------------
def compose_generator(params, c_in):
    """Fold w2_linear ∘ w1_linear and b_linear into one augmented matrix.

    Returns Waug [c_in*c_out + c_out, d+1]; the last column holds the composed
    biases (to be contracted against a ones row appended to mk^T).
    """
    f32 = jnp.float32
    w1_w = params["w1_w"].astype(f32)        # [c_in*d, d]
    w1_b = params["w1_b"].astype(f32)        # [c_in*d]
    w2_w = params["w2_w"].astype(f32)        # [c_out, d]
    w2_b = params["w2_b"].astype(f32)        # [c_out]
    b_w = params["b_w"].astype(f32)          # [c_out, d]
    b_b = params["b_b"].astype(f32)          # [c_out]
    c_out, d = w2_w.shape

    w1r = w1_w.reshape(c_in, d, d)                                   # [ci, k, j]
    wc = jnp.einsum("ok,ikj->ioj", w2_w, w1r)                        # [c_in, c_out, d]
    cc = jnp.einsum("ok,ik->io", w2_w, w1_b.reshape(c_in, d)) + w2_b[None, :]
    w_full = jnp.concatenate([wc.reshape(c_in * c_out, d), b_w], axis=0)
    c_full = jnp.concatenate([cc.reshape(c_in * c_out), b_b], axis=0)
    return jnp.concatenate([w_full, c_full[:, None]], axis=1)        # [R, d+1]


# ---------------------------------------------------------------------------
# Tile sizing: big lane-G tiles (amortize per-step overhead), >= 2 even grid
# steps (v7x 2-TC sharding), within a double-buffered VMEM budget.
# ---------------------------------------------------------------------------
def _choose_g_block(G, d1, c_in, c_out, T, *, max_gb=4096, chunk=512,
                    vmem_budget_bytes=24 * 1024 * 1024):
    if G <= 128:
        return G, G                              # single full-extent block
    if G <= 2 * chunk:
        gp = _round_up(G, 128)
        return gp, gp                            # single lane-aligned block
    bytes_per_group = 4 * (d1 + (c_in + c_out) * T)      # mkT_aug + x + out (f32)
    cap = vmem_budget_bytes // (2 * bytes_per_group)     # ~2x for double-buffering
    gb = max(chunk, min(max_gb, (cap // chunk) * chunk))
    steps = max(2, -(-G // gb))
    if steps % 2:
        steps += 1                               # even split across 2 TCs (v7x)
    gb = max(chunk, _round_up(-(-G // steps), chunk))
    gp = _round_up(G, gb)
    return gb, gp


# ---------------------------------------------------------------------------
# Lane-G entry point (groups on the last dim).  In the full model this layout
# should be kept across consecutive meta-linear calls.
# ---------------------------------------------------------------------------
def meta_linear_apply(w_aug, mkT, xg, *, max_gb=4096, chunk=512):
    """w_aug: [R, d+1]; mkT: [d, G]; xg: [c_in, T, G] -> [c_out, T, G]."""
    f32 = jnp.float32
    R, d1 = w_aug.shape
    c_in, T, G = xg.shape
    c_out = R // (c_in + 1)
    assert R == c_in * c_out + c_out
    assert chunk % 128 == 0

    mkT_aug = jnp.concatenate([mkT.astype(f32), jnp.ones((1, G), f32)], axis=0)
    xg = xg.astype(f32)

    Gb, Gp = _choose_g_block(G, d1, c_in, c_out, T, max_gb=max_gb, chunk=chunk)
    if Gp != G:
        mkT_aug = jnp.pad(mkT_aug, ((0, 0), (0, Gp - G)))
        xg = jnp.pad(xg, ((0, 0), (0, 0), (0, Gp - G)))

    # Bound the per-chunk generated-weight tile (wct) to ~32 vregs of live data.
    if Gb <= 128:
        k_chunk = Gb
    else:
        cap = max(128, ((32 * 1024) // max(R, 1)) // 128 * 128)
        k_chunk = min(chunk, cap, Gb)

    block_bytes = 4 * Gb * (d1 + (c_in + c_out) * T)
    vmem_limit = int(min(max(32 << 20, 3 * block_bytes + (8 << 20)), 64 << 20))

    kernel = functools.partial(_fused_meta_linear_kernel,
                               c_in=c_in, c_out=c_out, chunk=k_chunk)
    y = pl.pallas_call(
        kernel,
        out_shape=jax.ShapeDtypeStruct((c_out, T, Gp), f32),
        grid=(Gp // Gb,),
        in_specs=[
            pl.BlockSpec((d1, Gb), lambda i: (0, i)),
            pl.BlockSpec((c_in, T, Gb), lambda i: (0, 0, i)),
            # tiny composed generator weights stay resident in VMEM
            pl.BlockSpec((R, d1), lambda i: (0, 0)),
        ],
        out_specs=pl.BlockSpec((c_out, T, Gb), lambda i: (0, 0, i)),
        compiler_params=pltpu.CompilerParams(
            dimension_semantics=("parallel",),
            vmem_limit_bytes=vmem_limit),
    )(mkT_aug, xg, w_aug.astype(f32))
    return y[:, :, :G] if Gp != G else y


# ---------------------------------------------------------------------------
# NCHW wrapper (layout plumbing only; all math is in the kernel).
# ---------------------------------------------------------------------------
def meta_linear_forward(params, meta_knowledge, x, *, max_gb=4096, chunk=512):
    """meta_knowledge: [B, N, d]; x: [B, c_in, N, T] (NCHW) -> [B, c_out, N, T].

    TODO(synk): in the full meta_gwnet, keep activations in the lane-G
    [c, T, G] layout across consecutive meta-linear calls (and pad G = B*N to a
    multiple of 128 once at the model boundary) instead of re-transposing and
    re-padding per call; the relayouts below roughly double HBM traffic for
    this bandwidth-bound op.  bf16 activation blocks would halve it again.
    """
    B, N, d = meta_knowledge.shape
    _, c_in, _, T = x.shape
    c_out = params["b_w"].shape[0]
    G = B * N

    w_aug = compose_generator(params, c_in)        # tiny; amortize across calls
    mkT = meta_knowledge.reshape(G, d).T                                # [d, G]
    xg = jnp.transpose(x, (1, 3, 0, 2)).reshape(c_in, T, G)             # [c_in, T, G]

    y = meta_linear_apply(w_aug, mkT, xg, max_gb=max_gb, chunk=chunk)   # [c_out, T, G]
    y = y.reshape(c_out, T, B, N)
    return jnp.transpose(y, (2, 0, 3, 1))                               # [B, c_out, N, T]


# ---------------------------------------------------------------------------
# Parameters (deterministic, nn.Linear-style uniform init).
# ---------------------------------------------------------------------------
def init_params(key, meta_dim, c_in, c_out):
    d = meta_dim
    ks = jax.random.split(key, 6)

    def lin(kw, kb, out_f, in_f):
        bound = 1.0 / np.sqrt(in_f)
        w = jax.random.uniform(kw, (out_f, in_f), jnp.float32, -bound, bound)
        b = jax.random.uniform(kb, (out_f,), jnp.float32, -bound, bound)
        return w, b

    w1_w, w1_b = lin(ks[0], ks[1], c_in * d, d)      # w1_linear: d -> c_in*d
    w2_w, w2_b = lin(ks[2], ks[3], c_out * 1, d)     # w2_linear: d -> c_out*K (K=1)
    b_w, b_b = lin(ks[4], ks[5], c_out, d)           # b_linear : d -> c_out
    return dict(w1_w=w1_w, w1_b=w1_b, w2_w=w2_w, w2_b=w2_b, b_w=b_w, b_b=b_b)


# ---------------------------------------------------------------------------
# Pure-JAX reference (mirrors the PyTorch forward exactly, two-stage linears).
# ---------------------------------------------------------------------------
def reference_forward(params, meta_knowledge, x):
    B, N, d = meta_knowledge.shape
    _, c_in, _, T = x.shape
    c_out = params["b_w"].shape[0]
    G = B * N
    mk = meta_knowledge.reshape(G, d)
    h1 = (mk @ params["w1_w"].T + params["w1_b"]).reshape(G, c_in, d)
    w = h1 @ params["w2_w"].T + params["w2_b"]                    # [G, c_in, c_out]
    b = mk @ params["b_w"].T + params["b_b"]                      # [G, c_out]
    xg = jnp.transpose(x, (0, 2, 1, 3)).reshape(G, c_in, T)
    y = jnp.einsum("gic,git->gct", w, xg) + b[:, :, None]
    return y.reshape(B, N, c_out, T).transpose(0, 2, 1, 3)


def _check(params, mk, x, **kw):
    out = jax.block_until_ready(meta_linear_forward(params, mk, x, **kw))
    ref = reference_forward(params, mk, x)
    assert out.shape == ref.shape, (out.shape, ref.shape)
    np.testing.assert_allclose(np.asarray(out), np.asarray(ref), atol=1e-4, rtol=1e-4)


if __name__ == "__main__":
    meta_dim, c_in, c_out = 8, 4, 8

    # Case 1: tiny shapes (G = 8 < 128 -> single full-extent block).
    k_p, k_mk, k_x = jax.random.split(jax.random.PRNGKey(0), 3)
    params = init_params(k_p, meta_dim, c_in, c_out)
    mk1 = jax.random.normal(k_mk, (2, 4, meta_dim), jnp.float32)
    x1 = jax.random.normal(k_x, (2, c_in, 4, 8), jnp.float32)            # NCHW
    _check(params, mk1, x1)

    # Case 2: G = 520 -> single lane-aligned block Gb = Gp = 640 with padding
    # and a ragged in-kernel chunk loop (512 + 128).
    k_p2, k_mk2, k_x2 = jax.random.split(jax.random.PRNGKey(1), 3)
    params2 = init_params(k_p2, meta_dim, c_in, c_out)
    mk2 = jax.random.normal(k_mk2, (4, 130, meta_dim), jnp.float32)
    x2 = jax.random.normal(k_x2, (4, c_in, 130, 8), jnp.float32)
    _check(params2, mk2, x2)

    # Case 3: G = 1200 -> Gb = 1024, Gp = 2048, grid = (2,) "parallel"
    # (exercises multi-step pipelining / 2-TC sharding + tail padding).
    k_p3, k_mk3, k_x3 = jax.random.split(jax.random.PRNGKey(2), 3)
    params3 = init_params(k_p3, meta_dim, c_in, c_out)
    mk3 = jax.random.normal(k_mk3, (4, 300, meta_dim), jnp.float32)
    x3 = jax.random.normal(k_x3, (4, c_in, 300, 8), jnp.float32)
    _check(params3, mk3, x3)

    print("KERNEL_OK")
</pallas_src>

<mosaic_0001>
module attributes {stable_mosaic.version = 11 : i64} {
  func.func @_fused_meta_linear_kernel(%arg0: i32, %arg1: memref<9x8xf32, #tpu.memory_space<vmem>>, %arg2: memref<4x8x8xf32, #tpu.memory_space<vmem>>, %arg3: memref<40x9xf32, #tpu.memory_space<vmem>>, %arg4: memref<8x8x8xf32, #tpu.memory_space<vmem>>) attributes {dimension_semantics = [#tpu.dimension_semantics<parallel>], iteration_bounds = array<i64: 1>, scalar_prefetch = 0 : i64, scratch_operands = 0 : i64, tpu.core_type = #tpu.core_type<tc>, window_params = [{transform_indices = @transform_0, window_bounds = array<i64: 9, 8>}, {transform_indices = @transform_1, window_bounds = array<i64: 4, 8, 8>}, {pipeline_mode = #tpu.pipeline_mode<synchronous>, transform_indices = @transform_2, window_bounds = array<i64: 40, 9>}, {transform_indices = @transform_3, window_bounds = array<i64: 8, 8, 8>}]} {
    %c0 = arith.constant 0 : index
    %c0_0 = arith.constant 0 : index
    %0 = vector.load %arg3[%c0, %c0_0] : memref<40x9xf32, #tpu.memory_space<vmem>>, vector<40x9xf32>
    %c0_1 = arith.constant 0 : index
    %c0_2 = arith.constant 0 : index
    %1 = vector.load %arg1[%c0_1, %c0_2] : memref<9x8xf32, #tpu.memory_space<vmem>>, vector<9x8xf32>
    %cst = arith.constant dense<0.000000e+00> : vector<40x8xf32>
    %2 = tpu.matmul %0, %1, %cst {dimension_numbers = #tpu.dot_dimension_numbers<[1], [0], [0], [1], [0, 0, 1, 1], [], []>} : vector<40x9xf32>, vector<9x8xf32>, vector<40x8xf32> -> vector<40x8xf32>
    %3 = vector.extract_strided_slice %2 {offsets = [0, 0], sizes = [1, 8], strides = [1, 1]} : vector<40x8xf32> to vector<1x8xf32>
    %c0_3 = arith.constant 0 : index
    %c0_4 = arith.constant 0 : index
    %c0_5 = arith.constant 0 : index
    %4 = vector.load %arg2[%c0_3, %c0_4, %c0_5] : memref<4x8x8xf32, #tpu.memory_space<vmem>>, vector<1x8x8xf32>
    %5 = vector.shape_cast %4 : vector<1x8x8xf32> to vector<8x8xf32>
    %6 = vector.broadcast %3 : vector<1x8xf32> to vector<8x8xf32>
    %7 = arith.mulf %6, %5 : vector<8x8xf32>
    %8 = vector.extract_strided_slice %2 {offsets = [8, 0], sizes = [1, 8], strides = [1, 1]} : vector<40x8xf32> to vector<1x8xf32>
    %c1 = arith.constant 1 : index
    %c0_6 = arith.constant 0 : index
    %c0_7 = arith.constant 0 : index
    %9 = vector.load %arg2[%c1, %c0_6, %c0_7] : memref<4x8x8xf32, #tpu.memory_space<vmem>>, vector<1x8x8xf32>
    %10 = vector.shape_cast %9 : vector<1x8x8xf32> to vector<8x8xf32>
    %11 = vector.broadcast %8 : vector<1x8xf32> to vector<8x8xf32>
    %12 = arith.mulf %11, %10 : vector<8x8xf32>
    %13 = arith.addf %7, %12 : vector<8x8xf32>
    %14 = vector.extract_strided_slice %2 {offsets = [16, 0], sizes = [1, 8], strides = [1, 1]} : vector<40x8xf32> to vector<1x8xf32>
    %c2 = arith.constant 2 : index
    %c0_8 = arith.constant 0 : index
    %c0_9 = arith.constant 0 : index
    %15 = vector.load %arg2[%c2, %c0_8, %c0_9] : memref<4x8x8xf32, #tpu.memory_space<vmem>>, vector<1x8x8xf32>
    %16 = vector.shape_cast %15 : vector<1x8x8xf32> to vector<8x8xf32>
    %17 = vector.broadcast %14 : vector<1x8xf32> to vector<8x8xf32>
    %18 = arith.mulf %17, %16 : vector<8x8xf32>
    %19 = arith.addf %13, %18 : vector<8x8xf32>
    %20 = vector.extract_strided_slice %2 {offsets = [24, 0], sizes = [1, 8], strides = [1, 1]} : vector<40x8xf32> to vector<1x8xf32>
    %c3 = arith.constant 3 : index
    %c0_10 = arith.constant 0 : index
    %c0_11 = arith.constant 0 : index
    %21 = vector.load %arg2[%c3, %c0_10, %c0_11] : memref<4x8x8xf32, #tpu.memory_space<vmem>>, vector<1x8x8xf32>
    %22 = vector.shape_cast %21 : vector<1x8x8xf32> to vector<8x8xf32>
    %23 = vector.broadcast %20 : vector<1x8xf32> to vector<8x8xf32>
    %24 = arith.mulf %23, %22 : vector<8x8xf32>
    %25 = arith.addf %19, %24 : vector<8x8xf32>
    %26 = vector.extract_strided_slice %2 {offsets = [32, 0], sizes = [1, 8], strides = [1, 1]} : vector<40x8xf32> to vector<1x8xf32>
    %27 = vector.broadcast %26 : vector<1x8xf32> to vector<8x8xf32>
    %28 = arith.addf %25, %27 : vector<8x8xf32>
    %c0_12 = arith.constant 0 : index
    %c0_13 = arith.constant 0 : index
    %c0_14 = arith.constant 0 : index
    %29 = vector.load %arg4[%c0_12, %c0_13, %c0_14] : memref<8x8x8xf32, #tpu.memory_space<vmem>>, vector<1x8x8xf32>
    %30 = vector.shape_cast %29 : vector<1x8x8xf32> to vector<8x8xf32>
    %31 = vector.shape_cast %28 : vector<8x8xf32> to vector<1x8x8xf32>
    tpu.vector_store %arg4[%c0_12, %c0_13, %c0_14], %31 {strides = array<i32>} : memref<8x8x8xf32, #tpu.memory_space<vmem>>, vector<1x8x8xf32>,
    %32 = vector.extract_strided_slice %2 {offsets = [1, 0], sizes = [1, 8], strides = [1, 1]} : vector<40x8xf32> to vector<1x8xf32>
    %c0_15 = arith.constant 0 : index
    %c0_16 = arith.constant 0 : index
    %c0_17 = arith.constant 0 : index
    %33 = vector.load %arg2[%c0_15, %c0_16, %c0_17] : memref<4x8x8xf32, #tpu.memory_space<vmem>>, vector<1x8x8xf32>
    %34 = vector.shape_cast %33 : vector<1x8x8xf32> to vector<8x8xf32>
    %35 = vector.broadcast %32 : vector<1x8xf32> to vector<8x8xf32>
    %36 = arith.mulf %35, %34 : vector<8x8xf32>
    %37 = vector.extract_strided_slice %2 {offsets = [9, 0], sizes = [1, 8], strides = [1, 1]} : vector<40x8xf32> to vector<1x8xf32>
    %c1_18 = arith.constant 1 : index
    %c0_19 = arith.constant 0 : index
    %c0_20 = arith.constant 0 : index
    %38 = vector.load %arg2[%c1_18, %c0_19, %c0_20] : memref<4x8x8xf32, #tpu.memory_space<vmem>>, vector<1x8x8xf32>
    %39 = vector.shape_cast %38 : vector<1x8x8xf32> to vector<8x8xf32>
    %40 = vector.broadcast %37 : vector<1x8xf32> to vector<8x8xf32>
    %41 = arith.mulf %40, %39 : vector<8x8xf32>
    %42 = arith.addf %36, %41 : vector<8x8xf32>
    %43 = vector.extract_strided_slice %2 {offsets = [17, 0], sizes = [1, 8], strides = [1, 1]} : vector<40x8xf32> to vector<1x8xf32>
    %c2_21 = arith.constant 2 : index
    %c0_22 = arith.constant 0 : index
    %c0_23 = arith.constant 0 : index
    %44 = vector.load %arg2[%c2_21, %c0_22, %c0_23] : memref<4x8x8xf32, #tpu.memory_space<vmem>>, vector<1x8x8xf32>
    %45 = vector.shape_cast %44 : vector<1x8x8xf32> to vector<8x8xf32>
    %46 = vector.broadcast %43 : vector<1x8xf32> to vector<8x8xf32>
    %47 = arith.mulf %46, %45 : vector<8x8xf32>
    %48 = arith.addf %42, %47 : vector<8x8xf32>
    %49 = vector.extract_strided_slice %2 {offsets = [25, 0], sizes = [1, 8], strides = [1, 1]} : vector<40x8xf32> to vector<1x8xf32>
    %c3_24 = arith.constant 3 : index
    %c0_25 = arith.constant 0 : index
    %c0_26 = arith.constant 0 : index
    %50 = vector.load %arg2[%c3_24, %c0_25, %c0_26] : memref<4x8x8xf32, #tpu.memory_space<vmem>>, vector<1x8x8xf32>
    %51 = vector.shape_cast %50 : vector<1x8x8xf32> to vector<8x8xf32>
    %52 = vector.broadcast %49 : vector<1x8xf32> to vector<8x8xf32>
    %53 = arith.mulf %52, %51 : vector<8x8xf32>
    %54 = arith.addf %48, %53 : vector<8x8xf32>
    %55 = vector.extract_strided_slice %2 {offsets = [33, 0], sizes = [1, 8], strides = [1, 1]} : vector<40x8xf32> to vector<1x8xf32>
    %56 = vector.broadcast %55 : vector<1x8xf32> to vector<8x8xf32>
    %57 = arith.addf %54, %56 : vector<8x8xf32>
    %c1_27 = arith.constant 1 : index
    %c0_28 = arith.constant 0 : index
    %c0_29 = arith.constant 0 : index
    %58 = vector.load %arg4[%c1_27, %c0_28, %c0_29] : memref<8x8x8xf32, #tpu.memory_space<vmem>>, vector<1x8x8xf32>
    %59 = vector.shape_cast %58 : vector<1x8x8xf32> to vector<8x8xf32>
    %60 = vector.shape_cast %57 : vector<8x8xf32> to vector<1x8x8xf32>
    tpu.vector_store %arg4[%c1_27, %c0_28, %c0_29], %60 {strides = array<i32>} : memref<8x8x8xf32, #tpu.memory_space<vmem>>, vector<1x8x8xf32>,
    %61 = vector.extract_strided_slice %2 {offsets = [2, 0], sizes = [1, 8], strides = [1, 1]} : vector<40x8xf32> to vector<1x8xf32>
    %c0_30 = arith.constant 0 : index
    %c0_31 = arith.constant 0 : index
    %c0_32 = arith.constant 0 : index
    %62 = vector.load %arg2[%c0_30, %c0_31, %c0_32] : memref<4x8x8xf32, #tpu.memory_space<vmem>>, vector<1x8x8xf32>
    %63 = vector.shape_cast %62 : vector<1x8x8xf32> to vector<8x8xf32>
    %64 = vector.broadcast %61 : vector<1x8xf32> to vector<8x8xf32>
    %65 = arith.mulf %64, %63 : vector<8x8xf32>
    %66 = vector.extract_strided_slice %2 {offsets = [10, 0], sizes = [1, 8], strides = [1, 1]} : vector<40x8xf32> to vector<1x8xf32>
    %c1_33 = arith.constant 1 : index
    %c0_34 = arith.constant 0 : index
    %c0_35 = arith.constant 0 : index
    %67 = vector.load %arg2[%c1_33, %c0_34, %c0_35] : memref<4x8x8xf32, #tpu.memory_space<vmem>>, vector<1x8x8xf32>
    %68 = vector.shape_cast %67 : vector<1x8x8xf32> to vector<8x8xf32>
    %69 = vector.broadcast %66 : vector<1x8xf32> to vector<8x8xf32>
    %70 = arith.mulf %69, %68 : vector<8x8xf32>
    %71 = arith.addf %65, %70 : vector<8x8xf32>
    %72 = vector.extract_strided_slice %2 {offsets = [18, 0], sizes = [1, 8], strides = [1, 1]} : vector<40x8xf32> to vector<1x8xf32>
    %c2_36 = arith.constant 2 : index
    %c0_37 = arith.constant 0 : index
    %c0_38 = arith.constant 0 : index
    %73 = vector.load %arg2[%c2_36, %c0_37, %c0_38] : memref<4x8x8xf32, #tpu.memory_space<vmem>>, vector<1x8x8xf32>
    %74 = vector.shape_cast %73 : vector<1x8x8xf32> to vector<8x8xf32>
    %75 = vector.broadcast %72 : vector<1x8xf32> to vector<8x8xf32>
    %76 = arith.mulf %75, %74 : vector<8x8xf32>
    %77 = arith.addf %71, %76 : vector<8x8xf32>
    %78 = vector.extract_strided_slice %2 {offsets = [26, 0], sizes = [1, 8], strides = [1, 1]} : vector<40x8xf32> to vector<1x8xf32>
    %c3_39 = arith.constant 3 : index
    %c0_40 = arith.constant 0 : index
    %c0_41 = arith.constant 0 : index
    %79 = vector.load %arg2[%c3_39, %c0_40, %c0_41] : memref<4x8x8xf32, #tpu.memory_space<vmem>>, vector<1x8x8xf32>
    %80 = vector.shape_cast %79 : vector<1x8x8xf32> to vector<8x8xf32>
    %81 = vector.broadcast %78 : vector<1x8xf32> to vector<8x8xf32>
    %82 = arith.mulf %81, %80 : vector<8x8xf32>
    %83 = arith.addf %77, %82 : vector<8x8xf32>
    %84 = vector.extract_strided_slice %2 {offsets = [34, 0], sizes = [1, 8], strides = [1, 1]} : vector<40x8xf32> to vector<1x8xf32>
    %85 = vector.broadcast %84 : vector<1x8xf32> to vector<8x8xf32>
    %86 = arith.addf %83, %85 : vector<8x8xf32>
    %c2_42 = arith.constant 2 : index
    %c0_43 = arith.constant 0 : index
    %c0_44 = arith.constant 0 : index
    %87 = vector.load %arg4[%c2_42, %c0_43, %c0_44] : memref<8x8x8xf32, #tpu.memory_space<vmem>>, vector<1x8x8xf32>
    %88 = vector.shape_cast %87 : vector<1x8x8xf32> to vector<8x8xf32>
    %89 = vector.shape_cast %86 : vector<8x8xf32> to vector<1x8x8xf32>
    tpu.vector_store %arg4[%c2_42, %c0_43, %c0_44], %89 {strides = array<i32>} : memref<8x8x8xf32, #tpu.memory_space<vmem>>, vector<1x8x8xf32>,
    %90 = vector.extract_strided_slice %2 {offsets = [3, 0], sizes = [1, 8], strides = [1, 1]} : vector<40x8xf32> to vector<1x8xf32>
    %c0_45 = arith.constant 0 : index
    %c0_46 = arith.constant 0 : index
    %c0_47 = arith.constant 0 : index
    %91 = vector.load %arg2[%c0_45, %c0_46, %c0_47] : memref<4x8x8xf32, #tpu.memory_space<vmem>>, vector<1x8x8xf32>
    %92 = vector.shape_cast %91 : vector<1x8x8xf32> to vector<8x8xf32>
    %93 = vector.broadcast %90 : vector<1x8xf32> to vector<8x8xf32>
    %94 = arith.mulf %93, %92 : vector<8x8xf32>
    %95 = vector.extract_strided_slice %2 {offsets = [11, 0], sizes = [1, 8], strides = [1, 1]} : vector<40x8xf32> to vector<1x8xf32>
    %c1_48 = arith.constant 1 : index
    %c0_49 = arith.constant 0 : index
    %c0_50 = arith.constant 0 : index
    %96 = vector.load %arg2[%c1_48, %c0_49, %c0_50] : memref<4x8x8xf32, #tpu.memory_space<vmem>>, vector<1x8x8xf32>
    %97 = vector.shape_cast %96 : vector<1x8x8xf32> to vector<8x8xf32>
    %98 = vector.broadcast %95 : vector<1x8xf32> to vector<8x8xf32>
    %99 = arith.mulf %98, %97 : vector<8x8xf32>
    %100 = arith.addf %94, %99 : vector<8x8xf32>
    %101 = vector.extract_strided_slice %2 {offsets = [19, 0], sizes = [1, 8], strides = [1, 1]} : vector<40x8xf32> to vector<1x8xf32>
    %c2_51 = arith.constant 2 : index
    %c0_52 = arith.constant 0 : index
    %c0_53 = arith.constant 0 : index
    %102 = vector.load %arg2[%c2_51, %c0_52, %c0_53] : memref<4x8x8xf32, #tpu.memory_space<vmem>>, vector<1x8x8xf32>
    %103 = vector.shape_cast %102 : vector<1x8x8xf32> to vector<8x8xf32>
    %104 = vector.broadcast %101 : vector<1x8xf32> to vector<8x8xf32>
    %105 = arith.mulf %104, %103 : vector<8x8xf32>
    %106 = arith.addf %100, %105 : vector<8x8xf32>
    %107 = vector.extract_strided_slice %2 {offsets = [27, 0], sizes = [1, 8], strides = [1, 1]} : vector<40x8xf32> to vector<1x8xf32>
    %c3_54 = arith.constant 3 : index
    %c0_55 = arith.constant 0 : index
    %c0_56 = arith.constant 0 : index
    %108 = vector.load %arg2[%c3_54, %c0_55, %c0_56] : memref<4x8x8xf32, #tpu.memory_space<vmem>>, vector<1x8x8xf32>
    %109 = vector.shape_cast %108 : vector<1x8x8xf32> to vector<8x8xf32>
    %110 = vector.broadcast %107 : vector<1x8xf32> to vector<8x8xf32>
    %111 = arith.mulf %110, %109 : vector<8x8xf32>
    %112 = arith.addf %106, %111 : vector<8x8xf32>
    %113 = vector.extract_strided_slice %2 {offsets = [35, 0], sizes = [1, 8], strides = [1, 1]} : vector<40x8xf32> to vector<1x8xf32>
    %114 = vector.broadcast %113 : vector<1x8xf32> to vector<8x8xf32>
    %115 = arith.addf %112, %114 : vector<8x8xf32>
    %c3_57 = arith.constant 3 : index
    %c0_58 = arith.constant 0 : index
    %c0_59 = arith.constant 0 : index
    %116 = vector.load %arg4[%c3_57, %c0_58, %c0_59] : memref<8x8x8xf32, #tpu.memory_space<vmem>>, vector<1x8x8xf32>
    %117 = vector.shape_cast %116 : vector<1x8x8xf32> to vector<8x8xf32>
    %118 = vector.shape_cast %115 : vector<8x8xf32> to vector<1x8x8xf32>
    tpu.vector_store %arg4[%c3_57, %c0_58, %c0_59], %118 {strides = array<i32>} : memref<8x8x8xf32, #tpu.memory_space<vmem>>, vector<1x8x8xf32>,
    %119 = vector.extract_strided_slice %2 {offsets = [4, 0], sizes = [1, 8], strides = [1, 1]} : vector<40x8xf32> to vector<1x8xf32>
    %c0_60 = arith.constant 0 : index
    %c0_61 = arith.constant 0 : index
    %c0_62 = arith.constant 0 : index
    %120 = vector.load %arg2[%c0_60, %c0_61, %c0_62] : memref<4x8x8xf32, #tpu.memory_space<vmem>>, vector<1x8x8xf32>
    %121 = vector.shape_cast %120 : vector<1x8x8xf32> to vector<8x8xf32>
    %122 = vector.broadcast %119 : vector<1x8xf32> to vector<8x8xf32>
    %123 = arith.mulf %122, %121 : vector<8x8xf32>
    %124 = vector.extract_strided_slice %2 {offsets = [12, 0], sizes = [1, 8], strides = [1, 1]} : vector<40x8xf32> to vector<1x8xf32>
    %c1_63 = arith.constant 1 : index
    %c0_64 = arith.constant 0 : index
    %c0_65 = arith.constant 0 : index
    %125 = vector.load %arg2[%c1_63, %c0_64, %c0_65] : memref<4x8x8xf32, #tpu.memory_space<vmem>>, vector<1x8x8xf32>
    %126 = vector.shape_cast %125 : vector<1x8x8xf32> to vector<8x8xf32>
    %127 = vector.broadcast %124 : vector<1x8xf32> to vector<8x8xf32>
    %128 = arith.mulf %127, %126 : vector<8x8xf32>
    %129 = arith.addf %123, %128 : vector<8x8xf32>
    %130 = vector.extract_strided_slice %2 {offsets = [20, 0], sizes = [1, 8], strides = [1, 1]} : vector<40x8xf32> to vector<1x8xf32>
    %c2_66 = arith.constant 2 : index
    %c0_67 = arith.constant 0 : index
    %c0_68 = arith.constant 0 : index
    %131 = vector.load %arg2[%c2_66, %c0_67, %c0_68] : memref<4x8x8xf32, #tpu.memory_space<vmem>>, vector<1x8x8xf32>
    %132 = vector.shape_cast %131 : vector<1x8x8xf32> to vector<8x8xf32>
    %133 = vector.broadcast %130 : vector<1x8xf32> to vector<8x8xf32>
    %134 = arith.mulf %133, %132 : vector<8x8xf32>
    %135 = arith.addf %129, %134 : vector<8x8xf32>
    %136 = vector.extract_strided_slice %2 {offsets = [28, 0], sizes = [1, 8], strides = [1, 1]} : vector<40x8xf32> to vector<1x8xf32>
    %c3_69 = arith.constant 3 : index
    %c0_70 = arith.constant 0 : index
    %c0_71 = arith.constant 0 : index
    %137 = vector.load %arg2[%c3_69, %c0_70, %c0_71] : memref<4x8x8xf32, #tpu.memory_space<vmem>>, vector<1x8x8xf32>
    %138 = vector.shape_cast %137 : vector<1x8x8xf32> to vector<8x8xf32>
    %139 = vector.broadcast %136 : vector<1x8xf32> to vector<8x8xf32>
    %140 = arith.mulf %139, %138 : vector<8x8xf32>
    %141 = arith.addf %135, %140 : vector<8x8xf32>
    %142 = vector.extract_strided_slice %2 {offsets = [36, 0], sizes = [1, 8], strides = [1, 1]} : vector<40x8xf32> to vector<1x8xf32>
    %143 = vector.broadcast %142 : vector<1x8xf32> to vector<8x8xf32>
    %144 = arith.addf %141, %143 : vector<8x8xf32>
    %c4 = arith.constant 4 : index
    %c0_72 = arith.constant 0 : index
    %c0_73 = arith.constant 0 : index
    %145 = vector.load %arg4[%c4, %c0_72, %c0_73] : memref<8x8x8xf32, #tpu.memory_space<vmem>>, vector<1x8x8xf32>
    %146 = vector.shape_cast %145 : vector<1x8x8xf32> to vector<8x8xf32>
    %147 = vector.shape_cast %144 : vector<8x8xf32> to vector<1x8x8xf32>
    tpu.vector_store %arg4[%c4, %c0_72, %c0_73], %147 {strides = array<i32>} : memref<8x8x8xf32, #tpu.memory_space<vmem>>, vector<1x8x8xf32>,
    %148 = vector.extract_strided_slice %2 {offsets = [5, 0], sizes = [1, 8], strides = [1, 1]} : vector<40x8xf32> to vector<1x8xf32>
    %c0_74 = arith.constant 0 : index
    %c0_75 = arith.constant 0 : index
    %c0_76 = arith.constant 0 : index
    %149 = vector.load %arg2[%c0_74, %c0_75, %c0_76] : memref<4x8x8xf32, #tpu.memory_space<vmem>>, vector<1x8x8xf32>
    %150 = vector.shape_cast %149 : vector<1x8x8xf32> to vector<8x8xf32>
    %151 = vector.broadcast %148 : vector<1x8xf32> to vector<8x8xf32>
    %152 = arith.mulf %151, %150 : vector<8x8xf32>
    %153 = vector.extract_strided_slice %2 {offsets = [13, 0], sizes = [1, 8], strides = [1, 1]} : vector<40x8xf32> to vector<1x8xf32>
    %c1_77 = arith.constant 1 : index
    %c0_78 = arith.constant 0 : index
    %c0_79 = arith.constant 0 : index
    %154 = vector.load %arg2[%c1_77, %c0_78, %c0_79] : memref<4x8x8xf32, #tpu.memory_space<vmem>>, vector<1x8x8xf32>
    %155 = vector.shape_cast %154 : vector<1x8x8xf32> to vector<8x8xf32>
    %156 = vector.broadcast %153 : vector<1x8xf32> to vector<8x8xf32>
    %157 = arith.mulf %156, %155 : vector<8x8xf32>
    %158 = arith.addf %152, %157 : vector<8x8xf32>
    %159 = vector.extract_strided_slice %2 {offsets = [21, 0], sizes = [1, 8], strides = [1, 1]} : vector<40x8xf32> to vector<1x8xf32>
    %c2_80 = arith.constant 2 : index
    %c0_81 = arith.constant 0 : index
    %c0_82 = arith.constant 0 : index
    %160 = vector.load %arg2[%c2_80, %c0_81, %c0_82] : memref<4x8x8xf32, #tpu.memory_space<vmem>>, vector<1x8x8xf32>
    %161 = vector.shape_cast %160 : vector<1x8x8xf32> to vector<8x8xf32>
    %162 = vector.broadcast %159 : vector<1x8xf32> to vector<8x8xf32>
    %163 = arith.mulf %162, %161 : vector<8x8xf32>
    %164 = arith.addf %158, %163 : vector<8x8xf32>
    %165 = vector.extract_strided_slice %2 {offsets = [29, 0], sizes = [1, 8], strides = [1, 1]} : vector<40x8xf32> to vector<1x8xf32>
    %c3_83 = arith.constant 3 : index
    %c0_84 = arith.constant 0 : index
    %c0_85 = arith.constant 0 : index
    %166 = vector.load %arg2[%c3_83, %c0_84, %c0_85] : memref<4x8x8xf32, #tpu.memory_space<vmem>>, vector<1x8x8xf32>
    %167 = vector.shape_cast %166 : vector<1x8x8xf32> to vector<8x8xf32>
    %168 = vector.broadcast %165 : vector<1x8xf32> to vector<8x8xf32>
    %169 = arith.mulf %168, %167 : vector<8x8xf32>
    %170 = arith.addf %164, %169 : vector<8x8xf32>
    %171 = vector.extract_strided_slice %2 {offsets = [37, 0], sizes = [1, 8], strides = [1, 1]} : vector<40x8xf32> to vector<1x8xf32>
    %172 = vector.broadcast %171 : vector<1x8xf32> to vector<8x8xf32>
    %173 = arith.addf %170, %172 : vector<8x8xf32>
    %c5 = arith.constant 5 : index
    %c0_86 = arith.constant 0 : index
    %c0_87 = arith.constant 0 : index
    %174 = vector.load %arg4[%c5, %c0_86, %c0_87] : memref<8x8x8xf32, #tpu.memory_space<vmem>>, vector<1x8x8xf32>
    %175 = vector.shape_cast %174 : vector<1x8x8xf32> to vector<8x8xf32>
    %176 = vector.shape_cast %173 : vector<8x8xf32> to vector<1x8x8xf32>
    tpu.vector_store %arg4[%c5, %c0_86, %c0_87], %176 {strides = array<i32>} : memref<8x8x8xf32, #tpu.memory_space<vmem>>, vector<1x8x8xf32>,
    %177 = vector.extract_strided_slice %2 {offsets = [6, 0], sizes = [1, 8], strides = [1, 1]} : vector<40x8xf32> to vector<1x8xf32>
    %c0_88 = arith.constant 0 : index
    %c0_89 = arith.constant 0 : index
    %c0_90 = arith.constant 0 : index
    %178 = vector.load %arg2[%c0_88, %c0_89, %c0_90] : memref<4x8x8xf32, #tpu.memory_space<vmem>>, vector<1x8x8xf32>
    %179 = vector.shape_cast %178 : vector<1x8x8xf32> to vector<8x8xf32>
    %180 = vector.broadcast %177 : vector<1x8xf32> to vector<8x8xf32>
    %181 = arith.mulf %180, %179 : vector<8x8xf32>
    %182 = vector.extract_strided_slice %2 {offsets = [14, 0], sizes = [1, 8], strides = [1, 1]} : vector<40x8xf32> to vector<1x8xf32>
    %c1_91 = arith.constant 1 : index
    %c0_92 = arith.constant 0 : index
    %c0_93 = arith.constant 0 : index
    %183 = vector.load %arg2[%c1_91, %c0_92, %c0_93] : memref<4x8x8xf32, #tpu.memory_space<vmem>>, vector<1x8x8xf32>
    %184 = vector.shape_cast %183 : vector<1x8x8xf32> to vector<8x8xf32>
    %185 = vector.broadcast %182 : vector<1x8xf32> to vector<8x8xf32>
    %186 = arith.mulf %185, %184 : vector<8x8xf32>
    %187 = arith.addf %181, %186 : vector<8x8xf32>
    %188 = vector.extract_strided_slice %2 {offsets = [22, 0], sizes = [1, 8], strides = [1, 1]} : vector<40x8xf32> to vector<1x8xf32>
    %c2_94 = arith.constant 2 : index
    %c0_95 = arith.constant 0 : index
    %c0_96 = arith.constant 0 : index
    %189 = vector.load %arg2[%c2_94, %c0_95, %c0_96] : memref<4x8x8xf32, #tpu.memory_space<vmem>>, vector<1x8x8xf32>
    %190 = vector.shape_cast %189 : vector<1x8x8xf32> to vector<8x8xf32>
    %191 = vector.broadcast %188 : vector<1x8xf32> to vector<8x8xf32>
    %192 = arith.mulf %191, %190 : vector<8x8xf32>
    %193 = arith.addf %187, %192 : vector<8x8xf32>
    %194 = vector.extract_strided_slice %2 {offsets = [30, 0], sizes = [1, 8], strides = [1, 1]} : vector<40x8xf32> to vector<1x8xf32>
    %c3_97 = arith.constant 3 : index
    %c0_98 = arith.constant 0 : index
    %c0_99 = arith.constant 0 : index
    %195 = vector.load %arg2[%c3_97, %c0_98, %c0_99] : memref<4x8x8xf32, #tpu.memory_space<vmem>>, vector<1x8x8xf32>
    %196 = vector.shape_cast %195 : vector<1x8x8xf32> to vector<8x8xf32>
    %197 = vector.broadcast %194 : vector<1x8xf32> to vector<8x8xf32>
    %198 = arith.mulf %197, %196 : vector<8x8xf32>
    %199 = arith.addf %193, %198 : vector<8x8xf32>
    %200 = vector.extract_strided_slice %2 {offsets = [38, 0], sizes = [1, 8], strides = [1, 1]} : vector<40x8xf32> to vector<1x8xf32>
    %201 = vector.broadcast %200 : vector<1x8xf32> to vector<8x8xf32>
    %202 = arith.addf %199, %201 : vector<8x8xf32>
    %c6 = arith.constant 6 : index
    %c0_100 = arith.constant 0 : index
    %c0_101 = arith.constant 0 : index
    %203 = vector.load %arg4[%c6, %c0_100, %c0_101] : memref<8x8x8xf32, #tpu.memory_space<vmem>>, vector<1x8x8xf32>
    %204 = vector.shape_cast %203 : vector<1x8x8xf32> to vector<8x8xf32>
    %205 = vector.shape_cast %202 : vector<8x8xf32> to vector<1x8x8xf32>
    tpu.vector_store %arg4[%c6, %c0_100, %c0_101], %205 {strides = array<i32>} : memref<8x8x8xf32, #tpu.memory_space<vmem>>, vector<1x8x8xf32>,
    %206 = vector.extract_strided_slice %2 {offsets = [7, 0], sizes = [1, 8], strides = [1, 1]} : vector<40x8xf32> to vector<1x8xf32>
    %c0_102 = arith.constant 0 : index
    %c0_103 = arith.constant 0 : index
    %c0_104 = arith.constant 0 : index
    %207 = vector.load %arg2[%c0_102, %c0_103, %c0_104] : memref<4x8x8xf32, #tpu.memory_space<vmem>>, vector<1x8x8xf32>
    %208 = vector.shape_cast %207 : vector<1x8x8xf32> to vector<8x8xf32>
    %209 = vector.broadcast %206 : vector<1x8xf32> to vector<8x8xf32>
    %210 = arith.mulf %209, %208 : vector<8x8xf32>
    %211 = vector.extract_strided_slice %2 {offsets = [15, 0], sizes = [1, 8], strides = [1, 1]} : vector<40x8xf32> to vector<1x8xf32>
    %c1_105 = arith.constant 1 : index
    %c0_106 = arith.constant 0 : index
    %c0_107 = arith.constant 0 : index
    %212 = vector.load %arg2[%c1_105, %c0_106, %c0_107] : memref<4x8x8xf32, #tpu.memory_space<vmem>>, vector<1x8x8xf32>
    %213 = vector.shape_cast %212 : vector<1x8x8xf32> to vector<8x8xf32>
    %214 = vector.broadcast %211 : vector<1x8xf32> to vector<8x8xf32>
    %215 = arith.mulf %214, %213 : vector<8x8xf32>
    %216 = arith.addf %210, %215 : vector<8x8xf32>
    %217 = vector.extract_strided_slice %2 {offsets = [23, 0], sizes = [1, 8], strides = [1, 1]} : vector<40x8xf32> to vector<1x8xf32>
    %c2_108 = arith.constant 2 : index
    %c0_109 = arith.constant 0 : index
    %c0_110 = arith.constant 0 : index
    %218 = vector.load %arg2[%c2_108, %c0_109, %c0_110] : memref<4x8x8xf32, #tpu.memory_space<vmem>>, vector<1x8x8xf32>
    %219 = vector.shape_cast %218 : vector<1x8x8xf32> to vector<8x8xf32>
    %220 = vector.broadcast %217 : vector<1x8xf32> to vector<8x8xf32>
    %221 = arith.mulf %220, %219 : vector<8x8xf32>
    %222 = arith.addf %216, %221 : vector<8x8xf32>
    %223 = vector.extract_strided_slice %2 {offsets = [31, 0], sizes = [1, 8], strides = [1, 1]} : vector<40x8xf32> to vector<1x8xf32>
    %c3_111 = arith.constant 3 : index
    %c0_112 = arith.constant 0 : index
    %c0_113 = arith.constant 0 : index
    %224 = vector.load %arg2[%c3_111, %c0_112, %c0_113] : memref<4x8x8xf32, #tpu.memory_space<vmem>>, vector<1x8x8xf32>
    %225 = vector.shape_cast %224 : vector<1x8x8xf32> to vector<8x8xf32>
    %226 = vector.broadcast %223 : vector<1x8xf32> to vector<8x8xf32>
    %227 = arith.mulf %226, %225 : vector<8x8xf32>
    %228 = arith.addf %222, %227 : vector<8x8xf32>
    %229 = vector.extract_strided_slice %2 {offsets = [39, 0], sizes = [1, 8], strides = [1, 1]} : vector<40x8xf32> to vector<1x8xf32>
    %230 = vector.broadcast %229 : vector<1x8xf32> to vector<8x8xf32>
    %231 = arith.addf %228, %230 : vector<8x8xf32>
    %c7 = arith.constant 7 : index
    %c0_114 = arith.constant 0 : index
    %c0_115 = arith.constant 0 : index
    %232 = vector.load %arg4[%c7, %c0_114, %c0_115] : memref<8x8x8xf32, #tpu.memory_space<vmem>>, vector<1x8x8xf32>
    %233 = vector.shape_cast %232 : vector<1x8x8xf32> to vector<8x8xf32>
    %234 = vector.shape_cast %231 : vector<8x8xf32> to vector<1x8x8xf32>
    tpu.vector_store %arg4[%c7, %c0_114, %c0_115], %234 {strides = array<i32>} : memref<8x8x8xf32, #tpu.memory_space<vmem>>, vector<1x8x8xf32>,
    return
  }
  func.func @transform_0(%arg0: i32) -> (i32, i32) {
    %c0_i32 = arith.constant 0 : i32
    %c0_i32_0 = arith.constant 0 : i32
    return %c0_i32, %arg0 : i32, i32
  }
  func.func @transform_1(%arg0: i32) -> (i32, i32, i32) {
    %c0_i32 = arith.constant 0 : i32
    %c0_i32_0 = arith.constant 0 : i32
    %c0_i32_1 = arith.constant 0 : i32
    return %c0_i32, %c0_i32_0, %arg0 : i32, i32, i32
  }
  func.func @transform_2(%arg0: i32) -> (i32, i32) {
    %c0_i32 = arith.constant 0 : i32
    %c0_i32_0 = arith.constant 0 : i32
    %c0_i32_1 = arith.constant 0 : i32
    return %c0_i32, %c0_i32_0 : i32, i32
  }
  func.func @transform_3(%arg0: i32) -> (i32, i32, i32) {
    %c0_i32 = arith.constant 0 : i32
    %c0_i32_0 = arith.constant 0 : i32
    %c0_i32_1 = arith.constant 0 : i32
    return %c0_i32, %c0_i32_0, %arg0 : i32, i32, i32
  }
}

</mosaic_0001>

<llo_original>
// kernel: tpu_custom_call.1
$region0: #{tpu_custom_call.1}
  #allocation0 [shape = 'u32[]', space=smem, size = 0x4, offset = 0x4, fixed_abs, tag = 'smem constant byte address 0x4 - core index']
  #allocation1 [shape = 'u32[144,128]{1,0:T(1,128)}', space=vmem, size = 0x12000, scoped, tag = 'internal scratch']
  %s0 = inlined_call_operand.vmem [shape: f32[9,8], index: 0, kind: input, shape index: {}]
  %s1 = inlined_call_operand.vmem [shape: f32[4,8,8], index: 1, kind: input, shape index: {}]
  %s2 = inlined_call_operand.vmem [shape: f32[40,9], index: 2, kind: input, shape index: {}]
  %s3 = inlined_call_operand.hbm [shape: f32[8,8,8], index: 3, kind: output, shape index: {}]
  %s4 = sld [smem:[#allocation0]]
  $region22: #{tpu_custom_call.1} parent=0
    _
  %s6 = ssub.s32 1, %s4
  %s7 = scalar_select 0, %s6, %s4
  $region1: #{tpu_custom_call.1} parent=0
    #allocation2 [shape = 'u8[32768]{0}', space=vmem, size = 0x8000, scoped, tag = 'output window, operand 0, single buffered']
    #allocation3 [shape = 's32[1]{0}', space=sflag, size = 0x4, scoped, tag = 'scoped memory for tpu_custom_call.1']
    %8 = vsyncpa [#allocation3], 0
    // Predicated region
    $region2: #{tpu_custom_call.1} parent=1 // pred_check
      _
    $region3: #{tpu_custom_call.1} parent=1 // pred_check_branch
      %10 = sbr.rel (0) target = $region5
    $region4: #{tpu_custom_call.1} parent=1 // pred_region
      _
    $region5: #{tpu_custom_call.1} parent=1 // pred_fallthru
      _
    // Predicated region
    $region6: #{tpu_custom_call.1} parent=1 // pred_check
      _
    $region7: #{tpu_custom_call.1} parent=1 // pred_check_branch
      %12 = sbr.rel (0) target = $region9
    $region8: #{tpu_custom_call.1} parent=1 // pred_region
      _
    $region9: #{tpu_custom_call.1} parent=1 // pred_fallthru
      _
    // Predicated region
    $region10: #{tpu_custom_call.1} parent=1 // pred_check
      _
    $region11: #{tpu_custom_call.1} parent=1 // pred_check_branch
      %14 = sbr.rel (0) target = $region13
    $region12: #{tpu_custom_call.1} parent=1 // pred_region
      _
    $region13: #{tpu_custom_call.1} parent=1 // pred_fallthru
      _
    %v15 = vld [vmem:[%s2] sm:$0xff]
    %v16 = vld [vmem:[%s2 + $0x8] sm:$0xff]
    %v17 = vld [vmem:[%s2 + $0x10] sm:$0xff]
    %v18 = vld [vmem:[%s2 + $0x18] sm:$0xff]
    %v19 = vld [vmem:[%s2 + $0x20] sm:$0xff]
    %v20 = vld [vmem:[%s0] sm:$0xff]
    %v21 = vld [vmem:[%s0 + $0x8] sm:$0x1]
    %vm22 = vcmask 72704
    %v24 = vsel %vm22, %v15, 0
    %v27 = vsel %vm22, %v16, 0
    %v30 = vsel %vm22, %v17, 0
    %v33 = vsel %vm22, %v18, 0
    %v36 = vsel %vm22, %v19, 0
    %vm38 = vcmask 1040384
    %v40 = vsel %vm38, %v21, 0
    %42 = vmatprep.subr.mxu0 0.0
    %43 = vmatpush1.msra.mxu0 %v20
    %44 = vmatprep.subr.mxu0 0.0
    %45 = vmatpush1.msra.mxu0 %v40
    %46 = vmatprep.subr.mxu0 0.0
    %47 = vmatpush1.msra.mxu0 0.0
    %48 = vmatprep.subr.mxu0 0.0
    %49 = vmatpush1.msra.mxu0 0.0
    %50 = vmatprep.subr.mxu0 0.0
    %51 = vmatpush1.msra.mxu0 0.0
    %52 = vmatprep.subr.mxu0 0.0
    %53 = vmatpush1.msra.mxu0 0.0
    %54 = vmatprep.subr.mxu0 0.0
    %55 = vmatpush1.msra.mxu0 0.0
    %56 = vmatprep.subr.mxu0 0.0
    %57 = vmatpush1.msra.mxu0 0.0
    %58 = vmatprep.subr.mxu0 0.0
    %59 = vmatpush1.msra.mxu0 0.0
    %60 = vmatprep.subr.mxu0 0.0
    %61 = vmatpush1.msra.mxu0 0.0
    %62 = vmatprep.subr.mxu0 0.0
    %63 = vmatpush1.msra.mxu0 0.0
    %64 = vmatprep.subr.mxu0 0.0
    %65 = vmatpush1.msra.mxu0 0.0
    %66 = vmatprep.subr.mxu0 0.0
    %67 = vmatpush1.msra.mxu0 0.0
    %68 = vmatprep.subr.mxu0 0.0
    %69 = vmatpush1.msra.mxu0 0.0
    %70 = vmatprep.subr.mxu0 0.0
    %71 = vmatpush1.msra.mxu0 0.0
    %72 = vmatprep.subr.mxu0 0.0
    %73 = vmatpush1.msra.mxu0 0.0
    %74 = vmatprep.subr.mxu0 0.0
    %75 = vmatpush1.msra.mxu0 0.0
    %76 = vmatprep.subr.mxu0 0.0
    %77 = vmatpush1.msra.mxu0 0.0
    %78 = vmatprep.subr.mxu0 0.0
    %79 = vmatpush1.msra.mxu0 0.0
    %80 = vmatprep.subr.mxu0 0.0
    %81 = vmatpush1.msra.mxu0 0.0
    %82 = vmatprep.subr.mxu0 0.0
    %83 = vmatpush1.msra.mxu0 0.0
    %84 = vmatprep.subr.mxu0 0.0
    %85 = vmatpush1.msra.mxu0 0.0
    %86 = vmatprep.subr.mxu0 0.0
    %87 = vmatpush1.msra.mxu0 0.0
    %88 = vmatprep.subr.mxu0 0.0
    %89 = vmatpush1.msra.mxu0 0.0
    %90 = vmatprep.subr.mxu0 0.0
    %91 = vmatpush1.msra.mxu0 0.0
    %92 = vmatprep.subr.mxu0 0.0
    %93 = vmatpush1.msra.mxu0 0.0
    %94 = vmatprep.subr.mxu0 0.0
    %95 = vmatpush1.msra.mxu0 0.0
    %96 = vmatprep.subr.mxu0 0.0
    %97 = vmatpush1.msra.mxu0 0.0
    %98 = vmatprep.subr.mxu0 0.0
    %99 = vmatpush1.msra.mxu0 0.0
    %100 = vmatprep.subr.mxu0 0.0
    %101 = vmatpush1.msra.mxu0 0.0
    %102 = vmatprep.subr.mxu0 0.0
    %103 = vmatpush1.msra.mxu0 0.0
    %104 = vmatprep.subr.mxu0 0.0
    %105 = vmatpush1.msra.mxu0 0.0
    %106 = vmatprep.mubr.f32.mxu0 0.0
    %107 = vmatmul.mubr.f32.gmra.mrb[0].mxu0 %v24
    %v108 = vpop.f32.mrb[0].mxu0
    %v109 = vadd.f32 0.0, %v108
    %v110 = vpop.f32.mrb[0].mxu0
    %111 = vmatprep.mubr.f32.mxu0 0.0
    %112 = vmatmul.mubr.f32.gmra.mrb[0].mxu0 %v27
    %v113 = vpop.f32.mrb[0].mxu0
    %v114 = vadd.f32 0.0, %v113
    %v115 = vpop.f32.mrb[0].mxu0
    %116 = vmatprep.mubr.f32.mxu0 0.0
    %117 = vmatmul.mubr.f32.gmra.mrb[0].mxu0 %v30
    %v118 = vpop.f32.mrb[0].mxu0
    %v119 = vadd.f32 0.0, %v118
    %v120 = vpop.f32.mrb[0].mxu0
    %121 = vmatprep.mubr.f32.mxu0 0.0
    %122 = vmatmul.mubr.f32.gmra.mrb[0].mxu0 %v33
    %v123 = vpop.f32.mrb[0].mxu0
    %v124 = vadd.f32 0.0, %v123
    %v125 = vpop.f32.mrb[0].mxu0
    %126 = vmatprep.mubr.f32.mxu0 0.0
    %127 = vmatmul.mubr.f32.gmra.mrb[0].mxu0 %v36
    %v128 = vpop.f32.mrb[0].mxu0
    %v129 = vadd.f32 0.0, %v128
    %v130 = vpop.f32.mrb[0].mxu0
    %131 = vdwg.mxu0
    %v132 = vld [vmem:[%s1] sm:$0xff]
    %v133 = vlaneseq
    %v134 = vshrl.u32 %v133, 7
    %v135 = vsub.s32 0, %v134
    %v136 = vrot.slane %v109, %v135
    %v137 = vmul.f32 %v136, %v132
    %s138 = scalar_lea.vmem %s1, 8
    %v139 = vld [vmem:[%s138] sm:$0xff]
    %v140 = vlaneseq
    %v141 = vshrl.u32 %v140, 7
    %v142 = vsub.s32 0, %v141
    %v143 = vrot.slane %v114, %v142
    %v144 = vmul.f32 %v143, %v139
    %v145 = vadd.f32 %v137, %v144
    %s146 = scalar_lea.vmem %s1, 16
    %v147 = vld [vmem:[%s146] sm:$0xff]
    %v148 = vlaneseq
    %v149 = vshrl.u32 %v148, 7
    %v150 = vsub.s32 0, %v149
    %v151 = vrot.slane %v119, %v150
    %v152 = vmul.f32 %v151, %v147
    %v153 = vadd.f32 %v145, %v152
    %s154 = scalar_lea.vmem %s1, 24
    %v155 = vld [vmem:[%s154] sm:$0xff]
    %v156 = vlaneseq
    %v157 = vshrl.u32 %v156, 7
    %v158 = vsub.s32 0, %v157
    %v159 = vrot.slane %v124, %v158
    %v160 = vmul.f32 %v159, %v155
    %v161 = vadd.f32 %v153, %v160
    %v162 = vlaneseq
    %v163 = vshrl.u32 %v162, 7
    %v164 = vsub.s32 0, %v163
    %v165 = vrot.slane %v129, %v164
    %v166 = vadd.f32 %v161, %v165
    %vm167 = vcmask 64512
    %168 = vst.msk [vmem:[#allocation2] sm:$0xff] %vm167, %v166
    %v169 = vld [vmem:[%s1] sm:$0xff]
    %v170 = vlaneseq
    %v171 = vshrl.u32 %v170, 7
    %v172 = vsub.s32 1, %v171
    %v173 = vrot.slane %v109, %v172
    %v174 = vmul.f32 %v173, %v169
    %v175 = vld [vmem:[%s138] sm:$0xff]
    %v176 = vlaneseq
    %v177 = vshrl.u32 %v176, 7
    %v178 = vsub.s32 1, %v177
    %v179 = vrot.slane %v114, %v178
    %v180 = vmul.f32 %v179, %v175
    %v181 = vadd.f32 %v174, %v180
    %v182 = vld [vmem:[%s146] sm:$0xff]
    %v183 = vlaneseq
    %v184 = vshrl.u32 %v183, 7
    %v185 = vsub.s32 1, %v184
    %v186 = vrot.slane %v119, %v185
    %v187 = vmul.f32 %v186, %v182
    %v188 = vadd.f32 %v181, %v187
    %v189 = vld [vmem:[%s154] sm:$0xff]
    %v190 = vlaneseq
    %v191 = vshrl.u32 %v190, 7
    %v192 = vsub.s32 1, %v191
    %v193 = vrot.slane %v124, %v192
    %v194 = vmul.f32 %v193, %v189
    %v195 = vadd.f32 %v188, %v194
    %v196 = vlaneseq
    %v197 = vshrl.u32 %v196, 7
    %v198 = vsub.s32 1, %v197
    %v199 = vrot.slane %v129, %v198
    %v200 = vadd.f32 %v195, %v199
    %s201 = scalar_lea.vmem [#allocation2], 8
    %202 = vst.msk [vmem:[%s201] sm:$0xff] %vm167, %v200
    %v203 = vld [vmem:[%s1] sm:$0xff]
    %v204 = vlaneseq
    %v205 = vshrl.u32 %v204, 7
    %v206 = vsub.s32 2, %v205
    %v207 = vrot.slane %v109, %v206
    %v208 = vmul.f32 %v207, %v203
    %v209 = vld [vmem:[%s138] sm:$0xff]
    %v210 = vlaneseq
    %v211 = vshrl.u32 %v210, 7
    %v212 = vsub.s32 2, %v211
    %v213 = vrot.slane %v114, %v212
    %v214 = vmul.f32 %v213, %v209
    %v215 = vadd.f32 %v208, %v214
    %v216 = vld [vmem:[%s146] sm:$0xff]
    %v217 = vlaneseq
    %v218 = vshrl.u32 %v217, 7
    %v219 = vsub.s32 2, %v218
    %v220 = vrot.slane %v119, %v219
    %v221 = vmul.f32 %v220, %v216
    %v222 = vadd.f32 %v215, %v221
    %v223 = vld [vmem:[%s154] sm:$0xff]
    %v224 = vlaneseq
    %v225 = vshrl.u32 %v224, 7
    %v226 = vsub.s32 2, %v225
    %v227 = vrot.slane %v124, %v226
    %v228 = vmul.f32 %v227, %v223
    %v229 = vadd.f32 %v222, %v228
    %v230 = vlaneseq
    %v231 = vshrl.u32 %v230, 7
    %v232 = vsub.s32 2, %v231
    %v233 = vrot.slane %v129, %v232
    %v234 = vadd.f32 %v229, %v233
    %s235 = scalar_lea.vmem [#allocation2], 16
    %236 = vst.msk [vmem:[%s235] sm:$0xff] %vm167, %v234
    %v237 = vld [vmem:[%s1] sm:$0xff]
    %v238 = vlaneseq
    %v239 = vshrl.u32 %v238, 7
    %v240 = vsub.s32 3, %v239
    %v241 = vrot.slane %v109, %v240
    %v242 = vmul.f32 %v241, %v237
    %v243 = vld [vmem:[%s138] sm:$0xff]
    %v244 = vlaneseq
    %v245 = vshrl.u32 %v244, 7
    %v246 = vsub.s32 3, %v245
    %v247 = vrot.slane %v114, %v246
    %v248 = vmul.f32 %v247, %v243
    %v249 = vadd.f32 %v242, %v248
    %v250 = vld [vmem:[%s146] sm:$0xff]
    %v251 = vlaneseq
    %v252 = vshrl.u32 %v251, 7
    %v253 = vsub.s32 3, %v252
    %v254 = vrot.slane %v119, %v253
    %v255 = vmul.f32 %v254, %v250
    %v256 = vadd.f32 %v249, %v255
    %v257 = vld [vmem:[%s154] sm:$0xff]
    %v258 = vlaneseq
    %v259 = vshrl.u32 %v258, 7
    %v260 = vsub.s32 3, %v259
    %v261 = vrot.slane %v124, %v260
    %v262 = vmul.f32 %v261, %v257
    %v263 = vadd.f32 %v256, %v262
    %v264 = vlaneseq
    %v265 = vshrl.u32 %v264, 7
    %v266 = vsub.s32 3, %v265
    %v267 = vrot.slane %v129, %v266
    %v268 = vadd.f32 %v263, %v267
    %s269 = scalar_lea.vmem [#allocation2], 24
    %270 = vst.msk [vmem:[%s269] sm:$0xff] %vm167, %v268
    %v271 = vld [vmem:[%s1] sm:$0xff]
    %v272 = vlaneseq
    %v273 = vshrl.u32 %v272, 7
    %v274 = vsub.s32 4, %v273
    %v275 = vrot.slane %v109, %v274
    %v276 = vmul.f32 %v275, %v271
    %v277 = vld [vmem:[%s138] sm:$0xff]
    %v278 = vlaneseq
    %v279 = vshrl.u32 %v278, 7
    %v280 = vsub.s32 4, %v279
    %v281 = vrot.slane %v114, %v280
    %v282 = vmul.f32 %v281, %v277
    %v283 = vadd.f32 %v276, %v282
    %v284 = vld [vmem:[%s146] sm:$0xff]
    %v285 = vlaneseq
    %v286 = vshrl.u32 %v285, 7
    %v287 = vsub.s32 4, %v286
    %v288 = vrot.slane %v119, %v287
    %v289 = vmul.f32 %v288, %v284
    %v290 = vadd.f32 %v283, %v289
    %v291 = vld [vmem:[%s154] sm:$0xff]
    %v292 = vlaneseq
    %v293 = vshrl.u32 %v292, 7
    %v294 = vsub.s32 4, %v293
    %v295 = vrot.slane %v124, %v294
    %v296 = vmul.f32 %v295, %v291
    %v297 = vadd.f32 %v290, %v296
    %v298 = vlaneseq
    %v299 = vshrl.u32 %v298, 7
    %v300 = vsub.s32 4, %v299
    %v301 = vrot.slane %v129, %v300
    %v302 = vadd.f32 %v297, %v301
    %s303 = scalar_lea.vmem [#allocation2], 32
    %304 = vst.msk [vmem:[%s303] sm:$0xff] %vm167, %v302
    %v305 = vld [vmem:[%s1] sm:$0xff]
    %v306 = vlaneseq
    %v307 = vshrl.u32 %v306, 7
    %v308 = vsub.s32 5, %v307
    %v309 = vrot.slane %v109, %v308
    %v310 = vmul.f32 %v309, %v305
    %v311 = vld [vmem:[%s138] sm:$0xff]
    %v312 = vlaneseq
    %v313 = vshrl.u32 %v312, 7
    %v314 = vsub.s32 5, %v313
    %v315 = vrot.slane %v114, %v314
    %v316 = vmul.f32 %v315, %v311
    %v317 = vadd.f32 %v310, %v316
    %v318 = vld [vmem:[%s146] sm:$0xff]
    %v319 = vlaneseq
    %v320 = vshrl.u32 %v319, 7
    %v321 = vsub.s32 5, %v320
    %v322 = vrot.slane %v119, %v321
    %v323 = vmul.f32 %v322, %v318
    %v324 = vadd.f32 %v317, %v323
    %v325 = vld [vmem:[%s154] sm:$0xff]
    %v326 = vlaneseq
    %v327 = vshrl.u32 %v326, 7
    %v328 = vsub.s32 5, %v327
    %v329 = vrot.slane %v124, %v328
    %v330 = vmul.f32 %v329, %v325
    %v331 = vadd.f32 %v324, %v330
    %v332 = vlaneseq
    %v333 = vshrl.u32 %v332, 7
    %v334 = vsub.s32 5, %v333
    %v335 = vrot.slane %v129, %v334
    %v336 = vadd.f32 %v331, %v335
    %s337 = scalar_lea.vmem [#allocation2], 40
    %338 = vst.msk [vmem:[%s337] sm:$0xff] %vm167, %v336
    %v339 = vld [vmem:[%s1] sm:$0xff]
    %v340 = vlaneseq
    %v341 = vshrl.u32 %v340, 7
    %v342 = vsub.s32 6, %v341
    %v343 = vrot.slane %v109, %v342
    %v344 = vmul.f32 %v343, %v339
    %v345 = vld [vmem:[%s138] sm:$0xff]
    %v346 = vlaneseq
    %v347 = vshrl.u32 %v346, 7
    %v348 = vsub.s32 6, %v347
    %v349 = vrot.slane %v114, %v348
    %v350 = vmul.f32 %v349, %v345
    %v351 = vadd.f32 %v344, %v350
    %v352 = vld [vmem:[%s146] sm:$0xff]
    %v353 = vlaneseq
    %v354 = vshrl.u32 %v353, 7
    %v355 = vsub.s32 6, %v354
    %v356 = vrot.slane %v119, %v355
    %v357 = vmul.f32 %v356, %v352
    %v358 = vadd.f32 %v351, %v357
    %v359 = vld [vmem:[%s154] sm:$0xff]
    %v360 = vlaneseq
    %v361 = vshrl.u32 %v360, 7
    %v362 = vsub.s32 6, %v361
    %v363 = vrot.slane %v124, %v362
    %v364 = vmul.f32 %v363, %v359
    %v365 = vadd.f32 %v358, %v364
    %v366 = vlaneseq
    %v367 = vshrl.u32 %v366, 7
    %v368 = vsub.s32 6, %v367
    %v369 = vrot.slane %v129, %v368
    %v370 = vadd.f32 %v365, %v369
    %s371 = scalar_lea.vmem [#allocation2], 48
    %372 = vst.msk [vmem:[%s371] sm:$0xff] %vm167, %v370
    %v373 = vld [vmem:[%s1] sm:$0xff]
    %v374 = vlaneseq
    %v375 = vshrl.u32 %v374, 7
    %v376 = vsub.s32 7, %v375
    %v377 = vrot.slane %v109, %v376
    %v378 = vmul.f32 %v377, %v373
    %v379 = vld [vmem:[%s138] sm:$0xff]
    %v380 = vlaneseq
    %v381 = vshrl.u32 %v380, 7
    %v382 = vsub.s32 7, %v381
    %v383 = vrot.slane %v114, %v382
    %v384 = vmul.f32 %v383, %v379
    %v385 = vadd.f32 %v378, %v384
    %v386 = vld [vmem:[%s146] sm:$0xff]
    %v387 = vlaneseq
    %v388 = vshrl.u32 %v387, 7
    %v389 = vsub.s32 7, %v388
    %v390 = vrot.slane %v119, %v389
    %v391 = vmul.f32 %v390, %v386
    %v392 = vadd.f32 %v385, %v391
    %v393 = vld [vmem:[%s154] sm:$0xff]
    %v394 = vlaneseq
    %v395 = vshrl.u32 %v394, 7
    %v396 = vsub.s32 7, %v395
    %v397 = vrot.slane %v124, %v396
    %v398 = vmul.f32 %v397, %v393
    %v399 = vadd.f32 %v392, %v398
    %v400 = vlaneseq
    %v401 = vshrl.u32 %v400, 7
    %v402 = vsub.s32 7, %v401
    %v403 = vrot.slane %v129, %v402
    %v404 = vadd.f32 %v399, %v403
    %s405 = scalar_lea.vmem [#allocation2], 56
    %406 = vst.msk [vmem:[%s405] sm:$0xff] %vm167, %v404
    // Predicated region
    $region14: #{tpu_custom_call.1} parent=1 // pred_check
      _
    $region15: #{tpu_custom_call.1} parent=1 // pred_check_branch
      %408 = sbr.rel (0) target = $region17
    $region16: #{tpu_custom_call.1} parent=1 // pred_region
      %s410 = ssub.s32 1024, 1024
      %411 = vsyncadd [#allocation3], %s410
      %s412 = sshll.u32 [#allocation2], 4
      %s413 = int_to_ptr.vmem [resolvable:$true] %s412
      %418 = dma.vmem_to_hbm [thread:$0]  %s413, 1024, %s3, [#allocation3], 128, 128, 8
    $region17: #{tpu_custom_call.1} parent=1 // pred_fallthru
      _
    // Predicated region
    $region18: #{tpu_custom_call.1} parent=1 // pred_check
      _
    $region19: #{tpu_custom_call.1} parent=1 // pred_check_branch
      %420 = sbr.rel (0) target = $region21
    $region20: #{tpu_custom_call.1} parent=1 // pred_region
      %421 = dma.done [#allocation3], 1024
    $region21: #{tpu_custom_call.1} parent=1 // pred_fallthru
      _
    %422 = vsyncpa [#allocation3], 1

</llo_original>
